<compile_context>
chip_gen: v6e
topology: v6e:2x2x1
jax: 0.10.0
libtpu: 0.0.40
codegen_flags: <defaults>
</compile_context>

<pallas_src>
import functools
import math
import numpy as np

import jax
import jax.numpy as jnp
from jax.experimental import pallas as pl
from jax.experimental.pallas import tpu as pltpu

KERNEL_S = 5                      # 5x5 gabor kernels
N_THETA = 8                       # 8 orientations
N_GROUP = 9                       # sigmas(3) * lambdas(3) * gammas(1) * psis(1)
N_TAPS = KERNEL_S * KERNEL_S      # 25
N_CH = N_GROUP * N_THETA          # 72 conv output channels (torch: group*8 + theta)
LANE = 128


def gabor_bank(sigmas, lambdas, gammas, psis, thetas, indices):
    """Reproduces Net.gabor()'s filter-bank construction. Returns (72, 1, 5, 5)."""
    in_ch = sigmas.shape[0]
    s = sigmas.reshape(in_ch, sigmas.shape[1], 1, 1, 1, 1, 1, 1)
    l = lambdas.reshape(in_ch, 1, lambdas.shape[1], 1, 1, 1, 1, 1)
    g = gammas.reshape(in_ch, 1, 1, gammas.shape[1], 1, 1, 1, 1)
    p = psis.reshape(in_ch, 1, 1, 1, psis.shape[1], 1, 1, 1)
    t = thetas.reshape(in_ch, 1, 1, 1, 1, thetas.shape[1], 1, 1)
    y = indices.reshape(1, 1, 1, 1, 1, 1, -1, 1)
    x = indices.reshape(1, 1, 1, 1, 1, 1, 1, -1)
    sigma_x = s
    sigma_y = s / g
    sin_t = jnp.sin(t)
    cos_t = jnp.cos(t)
    y_theta = -x * sin_t + y * cos_t
    x_theta = x * cos_t + y * sin_t
    gb = jnp.exp(-0.5 * (x_theta ** 2 / sigma_x ** 2 + y_theta ** 2 / sigma_y ** 2)) \
        * jnp.cos(2.0 * math.pi * x_theta / l + p)
    return gb.reshape(-1, 1, KERNEL_S, KERNEL_S)


def gabor_conv_max_kernel(w_ref, p_ref, o_ref):
    """w_ref: (72, 25) filters, row = group*8 + theta, col = tap (dy*5 + dx).
    p_ref: (25, tn) transposed im2col patches (pixels on the lane axis).
    o_ref: (9, tn)  max-over-theta conv result (lane-dense store).
    """
    # One MXU matmul for all 72 channels of this pixel tile.  (A per-theta loop
    # of (9,25)@(25,tn) dots would re-stream the big RHS 8x through the MXU.)
    conv = jnp.dot(w_ref[...], p_ref[...], preferred_element_type=jnp.float32)
    # Channel index is group*8 + theta, so 72 -> (9, 8) is a layout-free,
    # 8-sublane-aligned split; reduce over theta with a plain max.
    c = conv.reshape(N_GROUP, N_THETA, conv.shape[-1])
    o_ref[...] = jnp.max(c, axis=1)


def _pick_tiling(HW, tile_n):
    """Pick the lane tile (multiple of 128) and padded pixel count.

    Tiny problems run as ONE step (no pointless split on 1-TensorCore gens);
    larger problems get an even step count >= 2 so both v7x cores get a
    balanced share of the "parallel" grid axis.
    """
    max_tn = max(LANE, (tile_n // LANE) * LANE)
    steps = max(1, pl.cdiv(HW, max_tn))
    if steps == 1 and HW > 8 * LANE:
        steps = 2                      # v7x: 2 cores; ~0.35us extra elsewhere
    if steps > 1 and steps % 2 == 1:
        steps += 1                     # even split -> balanced across 2 cores
    tn = pl.cdiv(pl.cdiv(HW, steps), LANE) * LANE
    return tn, steps * tn


@functools.partial(jax.jit, static_argnames=("tile_n",))
def gabor_forward(img, gb_bank, *, tile_n=16384):
    """img: (1, 1, H, W) float32; gb_bank: (72, 1, 5, 5). Returns (1, 9, H, W)."""
    N, C, H, W = img.shape
    assert N == 1 and C == 1
    pad = KERNEL_S // 2
    HW = H * W

    # --- glue (fused by jit into one XLA op): zero-pad + TRANSPOSED im2col
    # (25, H*W): taps on sublanes, pixels on lanes -> lane-dense kernel I/O and
    # no output transpose needed.
    padded = jnp.pad(img[0, 0].astype(jnp.float32), ((pad, pad), (pad, pad)))
    taps = []
    for dy in range(KERNEL_S):
        for dx in range(KERNEL_S):
            taps.append(padded[dy:dy + H, dx:dx + W].reshape(-1))
    patches_t = jnp.stack(taps, axis=0)              # (25, HW)

    tn, HW_pad = _pick_tiling(HW, tile_n)
    if HW_pad != HW:                                  # no-op for 16x16 / 512x512
        patches_t = jnp.pad(patches_t, ((0, 0), (0, HW_pad - HW)))

    # --- single packed weight matrix (72, 25).  torch channel index is already
    # group*8 + theta and tap order dy*5+dx matches the im2col rows.
    w_mat = gb_bank[:, 0].reshape(N_CH, N_TAPS).astype(jnp.float32)

    out = pl.pallas_call(
        gabor_conv_max_kernel,
        out_shape=jax.ShapeDtypeStruct((N_GROUP, HW_pad), jnp.float32),
        grid_spec=pltpu.PrefetchScalarGridSpec(
            num_scalar_prefetch=0,
            grid=(HW_pad // tn,),
            in_specs=[
                pl.BlockSpec((N_CH, N_TAPS), lambda i: (0, 0)),   # resident weights
                pl.BlockSpec((N_TAPS, tn), lambda i: (0, i)),     # pixel tile
            ],
            out_specs=pl.BlockSpec((N_GROUP, tn), lambda i: (0, i)),
        ),
        compiler_params=pltpu.CompilerParams(
            dimension_semantics=("parallel",),
            # ~10 MB/step at tn=16384 (2x patches buf + 2x out buf + (72,tn)
            # f32 intermediate + reduce temps); 32 MiB keeps headroom and lifts
            # v5e's 16 MiB scoped default (physical VMEM 128 MiB there).
            vmem_limit_bytes=32 * 1024 * 1024),
    )(w_mat, patches_t)

    # Output is already (channels, pixels): slice off pad tail, reshape only.
    return out[:, :HW].reshape(N_GROUP, H, W)[None]   # (1, 9, H, W)


def _reference(img, gb):
    conv = jax.lax.conv_general_dilated(
        img, gb, window_strides=(1, 1), padding=((2, 2), (2, 2)),
        dimension_numbers=("NCHW", "OIHW", "NCHW"))
    return conv.reshape(1, N_GROUP, N_THETA, img.shape[2], img.shape[3]).max(axis=2)


if __name__ == "__main__":
    key = jax.random.PRNGKey(0)
    k_img, k_img2, k_lam, k_sig = jax.random.split(key, 4)

    # deterministic parameter init (shapes from Net.__init__)
    lambdas = jax.random.uniform(k_lam, (1, 3), dtype=jnp.float32) * math.pi
    sigmas = jax.random.uniform(k_sig, (1, 3), dtype=jnp.float32) * 10.0
    gammas = jnp.array([[0.5]], dtype=jnp.float32)
    psis = jnp.array([[math.pi / 2]], dtype=jnp.float32)
    thetas = jnp.array([[math.pi / 8, math.pi / 4, 3 * math.pi / 8, math.pi / 2,
                         5 * math.pi / 8, 6 * math.pi / 8, 7 * math.pi / 8, math.pi]],
                       dtype=jnp.float32)
    indices = jnp.arange(KERNEL_S, dtype=jnp.float32) - (KERNEL_S - 1) / 2

    gb = gabor_bank(sigmas, lambdas, gammas, psis, thetas, indices)  # (72, 1, 5, 5)

    # small test (single-step path) + a slightly larger one (multi-step path).
    # Tolerance stays at 2e-2 because the MXU may evaluate the f32 matmul (and
    # XLA the reference conv) via bf16 passes; layout/ordering bugs would show
    # up as O(1) errors, which this still catches.
    for HH in (16, 64):
        img = jax.random.uniform(k_img if HH == 16 else k_img2,
                                 (1, 1, HH, HH), dtype=jnp.float32)
        out = gabor_forward(img, gb)
        out = jax.block_until_ready(out)
        assert out.shape == (1, N_GROUP, HH, HH)
        ref = _reference(img, gb)
        np.testing.assert_allclose(np.asarray(out), np.asarray(ref),
                                   rtol=2e-2, atol=2e-2)

    # TODO(synk): find_maxima / describe_torch need an external pretrained
    # SOSNet and undefined globals (window_size, stride); only the gabor hot
    # path (conv + max-over-theta) is implemented as a Pallas kernel.
    print("KERNEL_OK")
</pallas_src>

<mosaic_0001>
module attributes {stable_mosaic.version = 11 : i64} {
  func.func @gabor_conv_max_kernel(%arg0: i32, %arg1: memref<72x25xf32, #tpu.memory_space<vmem>>, %arg2: memref<25x256xf32, #tpu.memory_space<vmem>>, %arg3: memref<9x256xf32, #tpu.memory_space<vmem>>) attributes {dimension_semantics = [#tpu.dimension_semantics<parallel>], iteration_bounds = array<i64: 1>, scalar_prefetch = 0 : i64, scratch_operands = 0 : i64, tpu.core_type = #tpu.core_type<tc>, window_params = [{pipeline_mode = #tpu.pipeline_mode<synchronous>, transform_indices = @transform_0, window_bounds = array<i64: 72, 25>}, {transform_indices = @transform_1, window_bounds = array<i64: 25, 256>}, {transform_indices = @transform_2, window_bounds = array<i64: 9, 256>}]} {
    %c0 = arith.constant 0 : index
    %c0_0 = arith.constant 0 : index
    %0 = vector.load %arg1[%c0, %c0_0] : memref<72x25xf32, #tpu.memory_space<vmem>>, vector<72x25xf32>
    %c0_1 = arith.constant 0 : index
    %c0_2 = arith.constant 0 : index
    %1 = vector.load %arg2[%c0_1, %c0_2] : memref<25x256xf32, #tpu.memory_space<vmem>>, vector<25x256xf32>
    %cst = arith.constant dense<0.000000e+00> : vector<72x256xf32>
    %2 = tpu.matmul %0, %1, %cst {dimension_numbers = #tpu.dot_dimension_numbers<[1], [0], [0], [1], [0, 0, 1, 1], [], []>} : vector<72x25xf32>, vector<25x256xf32>, vector<72x256xf32> -> vector<72x256xf32>
    %3 = vector.shape_cast %2 : vector<72x256xf32> to vector<9x8x256xf32>
    %cst_3 = arith.constant dense<0xFF800000> : vector<9x256xf32>
    %4 = vector.multi_reduction <maximumf>, %3, %cst_3 [1] : vector<9x8x256xf32> to vector<9x256xf32>
    %c0_4 = arith.constant 0 : index
    %c0_5 = arith.constant 0 : index
    %5 = vector.load %arg3[%c0_4, %c0_5] : memref<9x256xf32, #tpu.memory_space<vmem>>, vector<9x256xf32>
    tpu.vector_store %arg3[%c0_4, %c0_5], %4 {strides = array<i32>} : memref<9x256xf32, #tpu.memory_space<vmem>>, vector<9x256xf32>,
    return
  }
  func.func @transform_0(%arg0: i32) -> (i32, i32) {
    %c0_i32 = arith.constant 0 : i32
    %c0_i32_0 = arith.constant 0 : i32
    %c0_i32_1 = arith.constant 0 : i32
    return %c0_i32, %c0_i32_0 : i32, i32
  }
  func.func @transform_1(%arg0: i32) -> (i32, i32) {
    %c0_i32 = arith.constant 0 : i32
    %c0_i32_0 = arith.constant 0 : i32
    return %c0_i32, %arg0 : i32, i32
  }
  func.func @transform_2(%arg0: i32) -> (i32, i32) {
    %c0_i32 = arith.constant 0 : i32
    %c0_i32_0 = arith.constant 0 : i32
    return %c0_i32, %arg0 : i32, i32
  }
}

</mosaic_0001>

<llo_original>
// kernel: squeeze.3
$region0: #{squeeze.3}
  %s0 = inlined_call_operand.vmem [shape: f32[72,5,5], index: 0, kind: input, shape index: {}]
  %s1 = inlined_call_operand.vmem [shape: f32[72,25], index: 1, kind: output, shape index: {}]
  %v2 = vld [vmem:[%s0] sm:$0x1f]
  %vm3 = vcmask 588800
  %4 = vst.msk [vmem:[%s1] sm:$0x1f] %vm3, %v2
  %s5 = scalar_lea.vmem %s0, 8
  %v6 = vld [vmem:[%s5] sm:$0x1f]
  %vm7 = vcmask 588800
  %s8 = scalar_lea.vmem %s1, 5
  %9 = vst.msk [vmem:[%s8] sm:$0x1f] %vm7, %v6
  %s10 = scalar_lea.vmem %s0, 16
  %v11 = vld [vmem:[%s10] sm:$0x1f]
  %vm12 = vcmask 588800
  %s13 = scalar_lea.vmem %s1, 10
  %14 = vst.msk [vmem:[%s13] sm:$0x1f] %vm12, %v11
  %s15 = scalar_lea.vmem %s0, 24
  %v16 = vld [vmem:[%s15] sm:$0x1f]
  %vm17 = vcmask 588800
  %s18 = scalar_lea.vmem %s1, 15
  %19 = vst.msk [vmem:[%s18] sm:$0x1f] %vm17, %v16
  %s20 = scalar_lea.vmem %s0, 32
  %v21 = vld [vmem:[%s20] sm:$0x1f]
  %vm22 = vcmask 588800
  %s23 = scalar_lea.vmem %s1, 20
  %24 = vst.msk [vmem:[%s23] sm:$0x1f] %vm22, %v21

// kernel: gabor_forward.1
$region0: #{gabor_forward.1}
  #allocation0 [shape = 'u32[]', space=smem, size = 0x4, offset = 0x4, fixed_abs, tag = 'smem constant byte address 0x4 - core index']
  #allocation1 [shape = 'u32[144,128]{1,0:T(1,128)}', space=vmem, size = 0x12000, scoped, tag = 'internal scratch']
  %s0 = inlined_call_operand.vmem [shape: f32[72,25], index: 0, kind: input, shape index: {}]
  %s1 = inlined_call_operand.vmem [shape: f32[25,256], index: 1, kind: input, shape index: {}]
  %s2 = inlined_call_operand.vmem [shape: f32[9,256], index: 2, kind: output, shape index: {}]
  %s3 = sld [smem:[#allocation0]]
  $region18: #{gabor_forward.1} parent=0
    _
  %s5 = ssub.s32 1, %s3
  %s6 = scalar_select 0, %s5, %s3
  // Predicated region
  $region2: #{gabor_forward.1} parent=0 // pred_check
    _
  $region3: #{gabor_forward.1} parent=0 // pred_check_branch
    %8 = sbr.rel (0) target = $region5
  $region4: #{gabor_forward.1} parent=0 // pred_region
    _
  $region5: #{gabor_forward.1} parent=0 // pred_fallthru
    _
  // Predicated region
  $region6: #{gabor_forward.1} parent=0 // pred_check
    _
  $region7: #{gabor_forward.1} parent=0 // pred_check_branch
    %10 = sbr.rel (0) target = $region9
  $region8: #{gabor_forward.1} parent=0 // pred_region
    _
  $region9: #{gabor_forward.1} parent=0 // pred_fallthru
    _
  %v11 = vld [vmem:[%s0] sm:$0xff]
  %v12 = vld [vmem:[%s0 + $0x8] sm:$0xff]
  %v13 = vld [vmem:[%s0 + $0x10] sm:$0xff]
  %v14 = vld [vmem:[%s0 + $0x18] sm:$0xff]
  %v15 = vld [vmem:[%s0 + $0x20] sm:$0xff]
  %v16 = vld [vmem:[%s0 + $0x28] sm:$0xff]
  %v17 = vld [vmem:[%s0 + $0x30] sm:$0xff]
  %v18 = vld [vmem:[%s0 + $0x38] sm:$0xff]
  %v19 = vld [vmem:[%s0 + $0x40] sm:$0xff]
  %v20 = vld [vmem:[%s1] sm:$0xff]
  %v21 = vld [vmem:[%s1 + $0x8] sm:$0xff]
  %v22 = vld [vmem:[%s1 + $0x10] sm:$0xff]
  %v23 = vld [vmem:[%s1 + $0x18] sm:$0xff]
  %v24 = vld [vmem:[%s1 + $0x20] sm:$0xff]
  %v25 = vld [vmem:[%s1 + $0x28] sm:$0xff]
  %v26 = vld [vmem:[%s1 + $0x30] sm:$0x1]
  %v27 = vld [vmem:[%s1 + $0x38] sm:$0x1]
  %vm28 = vcmask 203776
  %v30 = vsel %vm28, %v11, 0
  %v33 = vsel %vm28, %v12, 0
  %v36 = vsel %vm28, %v13, 0
  %v39 = vsel %vm28, %v14, 0
  %v42 = vsel %vm28, %v15, 0
  %v45 = vsel %vm28, %v16, 0
  %v48 = vsel %vm28, %v17, 0
  %v51 = vsel %vm28, %v18, 0
  %v54 = vsel %vm28, %v19, 0
  %vm56 = vcmask 1040384
  %v58 = vsel %vm56, %v26, 0
  %v61 = vsel %vm56, %v27, 0
  %63 = vmatprep.subr.mxu0 0.0
  %64 = vmatpush1.msra.mxu0 0.0
  %65 = vmatprep.subr.mxu0 0.0
  %66 = vmatpush1.msra.mxu0 0.0
  %67 = vmatprep.subr.mxu0 0.0
  %68 = vmatpush1.msra.mxu0 0.0
  %69 = vmatprep.subr.mxu0 0.0
  %70 = vmatpush1.msra.mxu0 0.0
  %71 = vmatprep.subr.mxu0 0.0
  %72 = vmatpush1.msra.mxu0 0.0
  %73 = vmatprep.subr.mxu0 0.0
  %74 = vmatpush1.msra.mxu0 0.0
  %75 = vmatprep.subr.mxu0 0.0
  %76 = vmatpush1.msra.mxu0 0.0
  %77 = vmatprep.subr.mxu0 0.0
  %78 = vmatpush1.msra.mxu0 0.0
  %79 = vmatprep.subr.mxu0 0.0
  %80 = vmatpush1.msra.mxu0 0.0
  %81 = vmatprep.subr.mxu0 0.0
  %82 = vmatpush1.msra.mxu0 0.0
  %83 = vmatprep.subr.mxu0 0.0
  %84 = vmatpush1.msra.mxu0 0.0
  %85 = vmatprep.subr.mxu0 0.0
  %86 = vmatpush1.msra.mxu0 0.0
  %87 = vmatprep.subr.mxu0 %v61
  %88 = vmatpush1.msra.mxu0 %v58
  %89 = vmatprep.subr.mxu0 %v25
  %90 = vmatpush1.msra.mxu0 %v24
  %91 = vmatprep.subr.mxu0 %v23
  %92 = vmatpush1.msra.mxu0 %v22
  %93 = vmatprep.subr.mxu0 %v21
  %94 = vmatpush1.msra.mxu0 %v20
  %95 = vmatprep.subr.mxu0 0.0
  %96 = vmatpush2.msra.mxu0 0.0
  %97 = vmatprep.subr.mxu0 0.0
  %98 = vmatpush2.msra.mxu0 0.0
  %99 = vmatprep.subr.mxu0 0.0
  %100 = vmatpush2.msra.mxu0 0.0
  %101 = vmatprep.subr.mxu0 0.0
  %102 = vmatpush2.msra.mxu0 0.0
  %103 = vmatprep.subr.mxu0 0.0
  %104 = vmatpush2.msra.mxu0 0.0
  %105 = vmatprep.subr.mxu0 0.0
  %106 = vmatpush2.msra.mxu0 0.0
  %107 = vmatprep.subr.mxu0 0.0
  %108 = vmatpush2.msra.mxu0 0.0
  %109 = vmatprep.subr.mxu0 0.0
  %110 = vmatpush2.msra.mxu0 0.0
  %111 = vmatprep.subr.mxu0 0.0
  %112 = vmatpush2.msra.mxu0 0.0
  %113 = vmatprep.subr.mxu0 0.0
  %114 = vmatpush2.msra.mxu0 0.0
  %115 = vmatprep.subr.mxu0 0.0
  %116 = vmatpush2.msra.mxu0 0.0
  %117 = vmatprep.subr.mxu0 0.0
  %118 = vmatpush2.msra.mxu0 0.0
  %119 = vmatprep.subr.mxu0 0.0
  %120 = vmatpush2.msra.mxu0 0.0
  %121 = vmatprep.subr.mxu0 0.0
  %122 = vmatpush2.msra.mxu0 0.0
  %123 = vmatprep.subr.mxu0 0.0
  %124 = vmatpush2.msra.mxu0 0.0
  %125 = vmatprep.subr.mxu0 0.0
  %126 = vmatpush2.msra.mxu0 0.0
  %127 = vmatprep.mubr.f32.mxu0 0.0
  %128 = vmatmul.mubr.f32.gmra.mxu0 %v30
  %v129 = vpop.f32.mrf.mxu0
  %v130 = vadd.f32 0.0, %v129
  %v131 = vpop.f32.mrf.mxu0
  %v132 = vadd.f32 0.0, %v131
  %133 = vmatprep.mubr.f32.mxu0 0.0
  %134 = vmatmul.mubr.f32.gmra.mxu0 %v33
  %v135 = vpop.f32.mrf.mxu0
  %v136 = vadd.f32 0.0, %v135
  %v137 = vpop.f32.mrf.mxu0
  %v138 = vadd.f32 0.0, %v137
  %139 = vmatprep.mubr.f32.mxu0 0.0
  %140 = vmatmul.mubr.f32.gmra.mxu0 %v36
  %v141 = vpop.f32.mrf.mxu0
  %v142 = vadd.f32 0.0, %v141
  %v143 = vpop.f32.mrf.mxu0
  %v144 = vadd.f32 0.0, %v143
  %145 = vmatprep.mubr.f32.mxu0 0.0
  %146 = vmatmul.mubr.f32.gmra.mxu0 %v39
  %v147 = vpop.f32.mrf.mxu0
  %v148 = vadd.f32 0.0, %v147
  %v149 = vpop.f32.mrf.mxu0
  %v150 = vadd.f32 0.0, %v149
  %151 = vmatprep.mubr.f32.mxu0 0.0
  %152 = vmatmul.mubr.f32.gmra.mxu0 %v42
  %v153 = vpop.f32.mrf.mxu0
  %v154 = vadd.f32 0.0, %v153
  %v155 = vpop.f32.mrf.mxu0
  %v156 = vadd.f32 0.0, %v155
  %157 = vmatprep.mubr.f32.mxu0 0.0
  %158 = vmatmul.mubr.f32.gmra.mxu0 %v45
  %v159 = vpop.f32.mrf.mxu0
  %v160 = vadd.f32 0.0, %v159
  %v161 = vpop.f32.mrf.mxu0
  %v162 = vadd.f32 0.0, %v161
  %163 = vmatprep.mubr.f32.mxu0 0.0
  %164 = vmatmul.mubr.f32.gmra.mxu0 %v48
  %v165 = vpop.f32.mrf.mxu0
  %v166 = vadd.f32 0.0, %v165
  %v167 = vpop.f32.mrf.mxu0
  %v168 = vadd.f32 0.0, %v167
  %169 = vmatprep.mubr.f32.mxu0 0.0
  %170 = vmatmul.mubr.f32.gmra.mxu0 %v51
  %v171 = vpop.f32.mrf.mxu0
  %v172 = vadd.f32 0.0, %v171
  %v173 = vpop.f32.mrf.mxu0
  %v174 = vadd.f32 0.0, %v173
  %175 = vmatprep.mubr.f32.mxu0 0.0
  %176 = vmatmul.mubr.f32.gmra.mxu0 %v54
  %v177 = vpop.f32.mrf.mxu0
  %v178 = vadd.f32 0.0, %v177
  %v179 = vpop.f32.mrf.mxu0
  %v180 = vadd.f32 0.0, %v179
  %181 = vdwg.mxu0
  %v182 = vrot.slane %v130, 4
  %v183 = vmax.f32 %v130, %v182
  %v184 = vrot.slane %v183, 2
  %v185 = vmax.f32 %v183, %v184
  %v186 = vrot.slane %v185, 1
  %v187 = vmax.f32 %v185, %v186
  %v188 = vrot.slane %v132, 4
  %v189 = vmax.f32 %v132, %v188
  %v190 = vrot.slane %v189, 2
  %v191 = vmax.f32 %v189, %v190
  %v192 = vrot.slane %v191, 1
  %v193 = vmax.f32 %v191, %v192
  %v194 = vrot.slane %v136, 4
  %v195 = vmax.f32 %v136, %v194
  %v196 = vrot.slane %v195, 2
  %v197 = vmax.f32 %v195, %v196
  %v198 = vrot.slane %v197, 1
  %v199 = vmax.f32 %v197, %v198
  %v200 = vrot.slane %v138, 4
  %v201 = vmax.f32 %v138, %v200
  %v202 = vrot.slane %v201, 2
  %v203 = vmax.f32 %v201, %v202
  %v204 = vrot.slane %v203, 1
  %v205 = vmax.f32 %v203, %v204
  %v206 = vrot.slane %v142, 4
  %v207 = vmax.f32 %v142, %v206
  %v208 = vrot.slane %v207, 2
  %v209 = vmax.f32 %v207, %v208
  %v210 = vrot.slane %v209, 1
  %v211 = vmax.f32 %v209, %v210
  %v212 = vrot.slane %v144, 4
  %v213 = vmax.f32 %v144, %v212
  %v214 = vrot.slane %v213, 2
  %v215 = vmax.f32 %v213, %v214
  %v216 = vrot.slane %v215, 1
  %v217 = vmax.f32 %v215, %v216
  %v218 = vrot.slane %v148, 4
  %v219 = vmax.f32 %v148, %v218
  %v220 = vrot.slane %v219, 2
  %v221 = vmax.f32 %v219, %v220
  %v222 = vrot.slane %v221, 1
  %v223 = vmax.f32 %v221, %v222
  %v224 = vrot.slane %v150, 4
  %v225 = vmax.f32 %v150, %v224
  %v226 = vrot.slane %v225, 2
  %v227 = vmax.f32 %v225, %v226
  %v228 = vrot.slane %v227, 1
  %v229 = vmax.f32 %v227, %v228
  %v230 = vrot.slane %v154, 4
  %v231 = vmax.f32 %v154, %v230
  %v232 = vrot.slane %v231, 2
  %v233 = vmax.f32 %v231, %v232
  %v234 = vrot.slane %v233, 1
  %v235 = vmax.f32 %v233, %v234
  %v236 = vrot.slane %v156, 4
  %v237 = vmax.f32 %v156, %v236
  %v238 = vrot.slane %v237, 2
  %v239 = vmax.f32 %v237, %v238
  %v240 = vrot.slane %v239, 1
  %v241 = vmax.f32 %v239, %v240
  %v242 = vrot.slane %v160, 4
  %v243 = vmax.f32 %v160, %v242
  %v244 = vrot.slane %v243, 2
  %v245 = vmax.f32 %v243, %v244
  %v246 = vrot.slane %v245, 1
  %v247 = vmax.f32 %v245, %v246
  %v248 = vrot.slane %v162, 4
  %v249 = vmax.f32 %v162, %v248
  %v250 = vrot.slane %v249, 2
  %v251 = vmax.f32 %v249, %v250
  %v252 = vrot.slane %v251, 1
  %v253 = vmax.f32 %v251, %v252
  %v254 = vrot.slane %v166, 4
  %v255 = vmax.f32 %v166, %v254
  %v256 = vrot.slane %v255, 2
  %v257 = vmax.f32 %v255, %v256
  %v258 = vrot.slane %v257, 1
  %v259 = vmax.f32 %v257, %v258
  %v260 = vrot.slane %v168, 4
  %v261 = vmax.f32 %v168, %v260
  %v262 = vrot.slane %v261, 2
  %v263 = vmax.f32 %v261, %v262
  %v264 = vrot.slane %v263, 1
  %v265 = vmax.f32 %v263, %v264
  %v266 = vrot.slane %v172, 4
  %v267 = vmax.f32 %v172, %v266
  %v268 = vrot.slane %v267, 2
  %v269 = vmax.f32 %v267, %v268
  %v270 = vrot.slane %v269, 1
  %v271 = vmax.f32 %v269, %v270
  %v272 = vrot.slane %v174, 4
  %v273 = vmax.f32 %v174, %v272
  %v274 = vrot.slane %v273, 2
  %v275 = vmax.f32 %v273, %v274
  %v276 = vrot.slane %v275, 1
  %v277 = vmax.f32 %v275, %v276
  %v278 = vrot.slane %v178, 4
  %v279 = vmax.f32 %v178, %v278
  %v280 = vrot.slane %v279, 2
  %v281 = vmax.f32 %v279, %v280
  %v282 = vrot.slane %v281, 1
  %v283 = vmax.f32 %v281, %v282
  %v284 = vrot.slane %v180, 4
  %v285 = vmax.f32 %v180, %v284
  %v286 = vrot.slane %v285, 2
  %v287 = vmax.f32 %v285, %v286
  %v288 = vrot.slane %v287, 1
  %v289 = vmax.f32 %v287, %v288
  %vm308 = vcmask 1041409
  %v309 = vsel %vm308, %v199, %v187
  %vm310 = vcmask 1042434
  %v311 = vsel %vm310, %v211, %v309
  %vm312 = vcmask 1043459
  %v313 = vsel %vm312, %v223, %v311
  %vm314 = vcmask 1044484
  %v315 = vsel %vm314, %v235, %v313
  %vm316 = vcmask 1045509
  %v317 = vsel %vm316, %v247, %v315
  %vm318 = vcmask 1046534
  %v319 = vsel %vm318, %v259, %v317
  %vm320 = vcmask 1047559
  %v321 = vsel %vm320, %v271, %v319
  %v322 = vsel %vm308, %v205, %v193
  %v323 = vsel %vm310, %v217, %v322
  %v324 = vsel %vm312, %v229, %v323
  %v325 = vsel %vm314, %v241, %v324
  %v326 = vsel %vm316, %v253, %v325
  %v327 = vsel %vm318, %v265, %v326
  %v328 = vsel %vm320, %v277, %v327
  %333 = vst [vmem:[%s2] sm:$0xff] %v321
  %334 = vst [vmem:[%s2 + $0x8] sm:$0xff] %v328
  %335 = vst [vmem:[%s2 + $0x10] sm:$0x1] %v283
  %336 = vst [vmem:[%s2 + $0x18] sm:$0x1] %v289
  // Predicated region
  $region10: #{gabor_forward.1} parent=0 // pred_check
    _
  $region11: #{gabor_forward.1} parent=0 // pred_check_branch
    %338 = sbr.rel (0) target = $region13
  $region12: #{gabor_forward.1} parent=0 // pred_region
    _
  $region13: #{gabor_forward.1} parent=0 // pred_fallthru
    _
  // Predicated region
  $region14: #{gabor_forward.1} parent=0 // pred_check
    _
  $region15: #{gabor_forward.1} parent=0 // pred_check_branch
    %340 = sbr.rel (0) target = $region17
  $region16: #{gabor_forward.1} parent=0 // pred_region
    _
  $region17: #{gabor_forward.1} parent=0 // pred_fallthru
    _

</llo_original>
